<compile_context>
chip_gen: v6e
topology: v6e:2x2x1
jax: 0.10.0
libtpu: 0.0.40
codegen_flags: <defaults>
</compile_context>

<pallas_src>
import functools

import jax
import jax.numpy as jnp
from jax import lax
from jax.experimental import pallas as pl
from jax.experimental.pallas import tpu as pltpu

_EPS = 1e-5  # PyTorch F.layer_norm default eps


# ----------------------------------------------------------------------------
# Kernels
# ----------------------------------------------------------------------------
def _layernorm_kernel(x_ref, gamma_ref, beta_ref, o_ref):
    """Standard path: normalization axis == lane axis.

    Single pass over x for the stats; FMA epilogue (no centered-x intermediate).
    """
    x = x_ref[...].astype(jnp.float32)            # (tile, dim)
    dim = x_ref.shape[-1]
    inv_dim = jnp.float32(1.0 / dim)
    mean = jnp.sum(x, axis=-1, keepdims=True) * inv_dim
    msq = jnp.sum(x * x, axis=-1, keepdims=True) * inv_dim
    var = msq - mean * mean                        # biased variance (F.layer_norm)
    inv = lax.rsqrt(var + _EPS)
    g = gamma_ref[...].astype(jnp.float32)         # (1, dim)
    b = beta_ref[...].astype(jnp.float32)          # (1, dim)
    scale = inv * g                                # (tile, dim)
    shift = b - mean * scale                       # (tile, dim)
    o_ref[...] = (x * scale + shift).astype(o_ref.dtype)


def _layernorm_folded_kernel(x_ref, gamma_ref, beta_ref, o_ref, *, dim):
    """Lane-folded path for small dim (dim < 128, 128 % dim == 0).

    k = width // dim original rows share the 128-lane axis, so every load and
    store is a full-width (unmasked) lane-dense access. Per-segment statistics
    use masked full-width reductions — only elementwise ops, iota and lane
    reductions (exact f32, no MXU precision concerns).
    """
    x = x_ref[...].astype(jnp.float32)             # (tile, width)
    width = x_ref.shape[-1]
    k = width // dim
    inv_dim = jnp.float32(1.0 / dim)
    lane = lax.broadcasted_iota(jnp.int32, (1, width), 1)
    xx = x * x
    mean = jnp.zeros_like(x)
    msq = jnp.zeros_like(x)
    for s in range(k):                             # trace-time loop, k <= 16
        m = jnp.logical_and(lane >= s * dim, lane < (s + 1) * dim)   # (1, width)
        xs = jnp.where(m, x, 0.0)
        xxs = jnp.where(m, xx, 0.0)
        mean_s = jnp.sum(xs, axis=-1, keepdims=True) * inv_dim       # (tile, 1)
        msq_s = jnp.sum(xxs, axis=-1, keepdims=True) * inv_dim       # (tile, 1)
        mean = jnp.where(m, mean_s, mean)          # broadcast segment stat to its lanes
        msq = jnp.where(m, msq_s, msq)
    var = msq - mean * mean
    inv = lax.rsqrt(var + _EPS)
    g = gamma_ref[...].astype(jnp.float32)         # (1, width) = gamma tiled k times
    b = beta_ref[...].astype(jnp.float32)
    scale = inv * g
    shift = b - mean * scale
    o_ref[...] = (x * scale + shift).astype(o_ref.dtype)


# ----------------------------------------------------------------------------
# Tiling / VMEM heuristics
# ----------------------------------------------------------------------------
def _sublane_multiple(dtype) -> int:
    itemsize = jnp.dtype(dtype).itemsize
    # Sub-32-bit dtypes pack along sublanes: bf16 needs 16, 8-bit needs 32.
    return {4: 8, 2: 16, 1: 32}.get(itemsize, 8)


def _round_up(x: int, m: int) -> int:
    return ((x + m - 1) // m) * m


def _vmem_capacity_bytes() -> int:
    try:
        return int(pltpu.get_tpu_info().vmem_capacity_bytes)
    except Exception:
        return 64 << 20  # conservative: assume v7x-sized (64 MiB) VMEM


def _choose_tile_rows(n_rows: int, width: int, dtype, vmem_capacity: int) -> int:
    """Largest row tile whose per-step footprint (double-buffered in+out blocks
    plus the f32 upcast intermediates materialized inside the kernel) fits the
    generation-appropriate budget."""
    itemsize = jnp.dtype(dtype).itemsize
    sublane = _sublane_multiple(dtype)
    # Per-row, per-step footprint:
    #   pipeline buffers: 2 (double-buffer) x (input + output) = 4 x width x itemsize
    #   in-kernel f32 intermediates (~x upcast, x*x / stats, y):  ~4 x width x 4
    per_row = 4 * width * itemsize + 4 * width * 4
    if vmem_capacity >= (96 << 20):
        budget = 48 << 20   # v5e / v6e: 128 MiB physical VMEM
    else:
        budget = 20 << 20   # v7x-class: 64 MiB physical / 32 MiB scoped default
    max_rows = max(sublane, budget // per_row)
    tile = min(4096, max_rows)
    needed = _round_up(n_rows, sublane)
    tile = min(tile, needed)
    tile = max(sublane, (tile // sublane) * sublane)
    return tile


# ----------------------------------------------------------------------------
# Public wrapper
# ----------------------------------------------------------------------------
def layer_norm(x, gamma, beta, *, tile_rows=None):
    """LayerNorm over the last axis of x with elementwise affine gamma/beta."""
    orig_shape = x.shape
    dim = orig_shape[-1]
    assert gamma.shape == (dim,) and beta.shape == (dim,)

    dtype = x.dtype
    itemsize = jnp.dtype(dtype).itemsize
    vmem_capacity = _vmem_capacity_bytes()

    x2d = x.reshape(-1, dim)
    n_rows = x2d.shape[0]

    # Lane-dense layout for small dim: fold k rows into the 128-lane axis so
    # stores are full-width unmasked vst's instead of masked 32-lane partials.
    fold = (dim < 128) and (128 % dim == 0) and (dim >= 8)
    if fold:
        k = 128 // dim
        width = 128
        pad = (-n_rows) % k
        if pad:
            x2d = jnp.concatenate([x2d, jnp.zeros((pad, dim), dtype)], axis=0)
        x_work = x2d.reshape(-1, width)
        gamma_w = jnp.tile(gamma, k).reshape(1, width)
        beta_w = jnp.tile(beta, k).reshape(1, width)
        kernel = functools.partial(_layernorm_folded_kernel, dim=dim)
    else:
        k = 1
        width = dim
        x_work = x2d
        gamma_w = gamma.reshape(1, width)
        beta_w = beta.reshape(1, width)
        kernel = _layernorm_kernel

    rows_w = x_work.shape[0]
    sublane = _sublane_multiple(dtype)

    if tile_rows is None:
        tile_rows = _choose_tile_rows(rows_w, width, dtype, vmem_capacity)
        # v7x-class chips have 2 TensorCores: make sure the "parallel" row axis
        # has >= 2 grid steps so both cores get work (only when rows allow it).
        if (vmem_capacity < (96 << 20)
                and pl.cdiv(rows_w, tile_rows) == 1
                and rows_w > sublane):
            half = _round_up((rows_w + 1) // 2, sublane)
            tile_rows = max(sublane, min(tile_rows, half))

    grid = (pl.cdiv(rows_w, tile_rows),)

    # Explicit VMEM limit: pipeline buffers + in-kernel f32 intermediates +
    # params + headroom, capped per generation (and below physical VMEM).
    block_bytes = tile_rows * width * itemsize
    interm_bytes = 4 * tile_rows * width * 4
    param_bytes = 2 * 2 * width * jnp.dtype(gamma.dtype).itemsize
    needed_vmem = 4 * block_bytes + interm_bytes + param_bytes + (4 << 20)
    cap = (96 << 20) if vmem_capacity >= (96 << 20) else (44 << 20)
    vmem_limit = int(min(max(needed_vmem, 16 << 20), cap, vmem_capacity))

    if fold:
        flops = rows_w * width * (6 * k + 8)
    else:
        flops = rows_w * width * 8
    cost = pl.CostEstimate(
        flops=int(flops),
        transcendentals=int(n_rows),
        bytes_accessed=int(2 * rows_w * width * itemsize + 2 * width * 4),
    )

    out_work = pl.pallas_call(
        kernel,
        out_shape=jax.ShapeDtypeStruct((rows_w, width), dtype),
        grid_spec=pltpu.PrefetchScalarGridSpec(
            num_scalar_prefetch=0,
            grid=grid,
            in_specs=[
                pl.BlockSpec((tile_rows, width), lambda i: (i, 0)),
                pl.BlockSpec((1, width), lambda i: (0, 0)),
                pl.BlockSpec((1, width), lambda i: (0, 0)),
            ],
            out_specs=pl.BlockSpec((tile_rows, width), lambda i: (i, 0)),
        ),
        compiler_params=pltpu.CompilerParams(
            dimension_semantics=("parallel",),
            vmem_limit_bytes=vmem_limit,
        ),
        cost_estimate=cost,
    )(x_work, gamma_w, beta_w)

    if fold:
        out2d = out_work.reshape(-1, dim)[:n_rows]
    else:
        out2d = out_work
    return out2d.reshape(orig_shape)


# ----------------------------------------------------------------------------
# Reference + smoke test
# ----------------------------------------------------------------------------
def _reference_layer_norm(x, gamma, beta):
    xf = x.astype(jnp.float32)
    mean = jnp.mean(xf, axis=-1, keepdims=True)
    var = jnp.mean((xf - mean) ** 2, axis=-1, keepdims=True)
    y = (xf - mean) / jnp.sqrt(var + _EPS)
    return (y * gamma + beta).astype(x.dtype)


if __name__ == "__main__":
    key = jax.random.PRNGKey(0)
    batch, seq, dim = 2, 8, 32

    x = jax.random.normal(key, (batch, seq, dim), dtype=jnp.float32)

    # nn.Parameter(torch.ones(dim)) and register_buffer('beta', torch.zeros(dim)).
    gamma = jnp.ones((dim,), dtype=jnp.float32)
    beta = jnp.zeros((dim,), dtype=jnp.float32)

    # Small-dim (lane-folded) path.
    out = jax.block_until_ready(layer_norm(x, gamma, beta))
    ref = _reference_layer_norm(x, gamma, beta)
    assert out.shape == x.shape
    assert jnp.allclose(out, ref, atol=1e-5, rtol=1e-5), float(jnp.max(jnp.abs(out - ref)))

    # Also exercise the standard (dim >= 128) path.
    dim2 = 256
    k2 = jax.random.PRNGKey(1)
    x2 = jax.random.normal(k2, (batch, seq, dim2), dtype=jnp.float32)
    g2 = jnp.ones((dim2,), dtype=jnp.float32)
    b2 = jnp.zeros((dim2,), dtype=jnp.float32)
    out2 = jax.block_until_ready(layer_norm(x2, g2, b2))
    ref2 = _reference_layer_norm(x2, g2, b2)
    assert out2.shape == x2.shape
    assert jnp.allclose(out2, ref2, atol=1e-5, rtol=1e-5), float(jnp.max(jnp.abs(out2 - ref2)))

    print("KERNEL_OK")
</pallas_src>

<mosaic_0001>
module attributes {stable_mosaic.version = 11 : i64} {
  func.func @_layernorm_folded_kernel(%arg0: i32, %arg1: memref<8x128xf32, #tpu.memory_space<vmem>>, %arg2: memref<1x128xf32, #tpu.memory_space<vmem>>, %arg3: memref<1x128xf32, #tpu.memory_space<vmem>>, %arg4: memref<8x128xf32, #tpu.memory_space<vmem>>) attributes {dimension_semantics = [#tpu.dimension_semantics<parallel>], iteration_bounds = array<i64: 1>, scalar_prefetch = 0 : i64, scratch_operands = 0 : i64, tpu.core_type = #tpu.core_type<tc>, window_params = [{transform_indices = @transform_0, window_bounds = array<i64: 8, 128>}, {pipeline_mode = #tpu.pipeline_mode<synchronous>, transform_indices = @transform_1, window_bounds = array<i64: 1, 128>}, {pipeline_mode = #tpu.pipeline_mode<synchronous>, transform_indices = @transform_2, window_bounds = array<i64: 1, 128>}, {transform_indices = @transform_3, window_bounds = array<i64: 8, 128>}]} {
    %c0 = arith.constant 0 : index
    %c0_0 = arith.constant 0 : index
    %0 = vector.load %arg1[%c0, %c0_0] : memref<8x128xf32, #tpu.memory_space<vmem>>, vector<8x128xf32>
    %1 = tpu.iota {dimensions = array<i32: 1>} : vector<1x128xi32>
    %2 = arith.mulf %0, %0 : vector<8x128xf32>
    %cst = arith.constant 0.000000e+00 : f32
    %3 = vector.broadcast %cst : f32 to vector<8x128xf32>
    %cst_1 = arith.constant 0.000000e+00 : f32
    %4 = vector.broadcast %cst_1 : f32 to vector<8x128xf32>
    %c0_i32 = arith.constant 0 : i32
    %5 = vector.broadcast %c0_i32 : i32 to vector<1x128xi32>
    %6 = arith.cmpi sge, %1, %5 : vector<1x128xi32>
    %c32_i32 = arith.constant 32 : i32
    %7 = vector.broadcast %c32_i32 : i32 to vector<1x128xi32>
    %8 = arith.cmpi slt, %1, %7 : vector<1x128xi32>
    %9 = arith.andi %6, %8 : vector<1x128xi1>
    %cst_2 = arith.constant 0.000000e+00 : f32
    %10 = vector.shape_cast %9 : vector<1x128xi1> to vector<1x128xi1>
    %11 = vector.broadcast %10 : vector<1x128xi1> to vector<8x128xi1>
    %12 = vector.broadcast %cst_2 : f32 to vector<8x128xf32>
    %13 = arith.select %11, %0, %12 : vector<8x128xi1>, vector<8x128xf32>
    %cst_3 = arith.constant 0.000000e+00 : f32
    %14 = vector.shape_cast %9 : vector<1x128xi1> to vector<1x128xi1>
    %15 = vector.broadcast %14 : vector<1x128xi1> to vector<8x128xi1>
    %16 = vector.broadcast %cst_3 : f32 to vector<8x128xf32>
    %17 = arith.select %15, %2, %16 : vector<8x128xi1>, vector<8x128xf32>
    %cst_4 = arith.constant dense<0.000000e+00> : vector<8xf32>
    %18 = vector.multi_reduction <add>, %13, %cst_4 [1] : vector<8x128xf32> to vector<8xf32>
    %19 = vector.shape_cast %18 : vector<8xf32> to vector<8x1xf32>
    %cst_5 = arith.constant 3.125000e-02 : f32
    %20 = vector.broadcast %cst_5 : f32 to vector<8x1xf32>
    %21 = arith.mulf %19, %20 : vector<8x1xf32>
    %cst_6 = arith.constant dense<0.000000e+00> : vector<8xf32>
    %22 = vector.multi_reduction <add>, %17, %cst_6 [1] : vector<8x128xf32> to vector<8xf32>
    %23 = vector.shape_cast %22 : vector<8xf32> to vector<8x1xf32>
    %cst_7 = arith.constant 3.125000e-02 : f32
    %24 = vector.broadcast %cst_7 : f32 to vector<8x1xf32>
    %25 = arith.mulf %23, %24 : vector<8x1xf32>
    %26 = vector.shape_cast %9 : vector<1x128xi1> to vector<1x128xi1>
    %27 = vector.broadcast %26 : vector<1x128xi1> to vector<8x128xi1>
    %28 = vector.shape_cast %21 : vector<8x1xf32> to vector<8x1xf32>
    %29 = vector.broadcast %28 : vector<8x1xf32> to vector<8x128xf32>
    %30 = arith.select %27, %29, %3 : vector<8x128xi1>, vector<8x128xf32>
    %31 = vector.shape_cast %9 : vector<1x128xi1> to vector<1x128xi1>
    %32 = vector.broadcast %31 : vector<1x128xi1> to vector<8x128xi1>
    %33 = vector.shape_cast %25 : vector<8x1xf32> to vector<8x1xf32>
    %34 = vector.broadcast %33 : vector<8x1xf32> to vector<8x128xf32>
    %35 = arith.select %32, %34, %4 : vector<8x128xi1>, vector<8x128xf32>
    %c32_i32_8 = arith.constant 32 : i32
    %36 = vector.broadcast %c32_i32_8 : i32 to vector<1x128xi32>
    %37 = arith.cmpi sge, %1, %36 : vector<1x128xi32>
    %c64_i32 = arith.constant 64 : i32
    %38 = vector.broadcast %c64_i32 : i32 to vector<1x128xi32>
    %39 = arith.cmpi slt, %1, %38 : vector<1x128xi32>
    %40 = arith.andi %37, %39 : vector<1x128xi1>
    %cst_9 = arith.constant 0.000000e+00 : f32
    %41 = vector.shape_cast %40 : vector<1x128xi1> to vector<1x128xi1>
    %42 = vector.broadcast %41 : vector<1x128xi1> to vector<8x128xi1>
    %43 = vector.broadcast %cst_9 : f32 to vector<8x128xf32>
    %44 = arith.select %42, %0, %43 : vector<8x128xi1>, vector<8x128xf32>
    %cst_10 = arith.constant 0.000000e+00 : f32
    %45 = vector.shape_cast %40 : vector<1x128xi1> to vector<1x128xi1>
    %46 = vector.broadcast %45 : vector<1x128xi1> to vector<8x128xi1>
    %47 = vector.broadcast %cst_10 : f32 to vector<8x128xf32>
    %48 = arith.select %46, %2, %47 : vector<8x128xi1>, vector<8x128xf32>
    %cst_11 = arith.constant dense<0.000000e+00> : vector<8xf32>
    %49 = vector.multi_reduction <add>, %44, %cst_11 [1] : vector<8x128xf32> to vector<8xf32>
    %50 = vector.shape_cast %49 : vector<8xf32> to vector<8x1xf32>
    %cst_12 = arith.constant 3.125000e-02 : f32
    %51 = vector.broadcast %cst_12 : f32 to vector<8x1xf32>
    %52 = arith.mulf %50, %51 : vector<8x1xf32>
    %cst_13 = arith.constant dense<0.000000e+00> : vector<8xf32>
    %53 = vector.multi_reduction <add>, %48, %cst_13 [1] : vector<8x128xf32> to vector<8xf32>
    %54 = vector.shape_cast %53 : vector<8xf32> to vector<8x1xf32>
    %cst_14 = arith.constant 3.125000e-02 : f32
    %55 = vector.broadcast %cst_14 : f32 to vector<8x1xf32>
    %56 = arith.mulf %54, %55 : vector<8x1xf32>
    %57 = vector.shape_cast %40 : vector<1x128xi1> to vector<1x128xi1>
    %58 = vector.broadcast %57 : vector<1x128xi1> to vector<8x128xi1>
    %59 = vector.shape_cast %52 : vector<8x1xf32> to vector<8x1xf32>
    %60 = vector.broadcast %59 : vector<8x1xf32> to vector<8x128xf32>
    %61 = arith.select %58, %60, %30 : vector<8x128xi1>, vector<8x128xf32>
    %62 = vector.shape_cast %40 : vector<1x128xi1> to vector<1x128xi1>
    %63 = vector.broadcast %62 : vector<1x128xi1> to vector<8x128xi1>
    %64 = vector.shape_cast %56 : vector<8x1xf32> to vector<8x1xf32>
    %65 = vector.broadcast %64 : vector<8x1xf32> to vector<8x128xf32>
    %66 = arith.select %63, %65, %35 : vector<8x128xi1>, vector<8x128xf32>
    %c64_i32_15 = arith.constant 64 : i32
    %67 = vector.broadcast %c64_i32_15 : i32 to vector<1x128xi32>
    %68 = arith.cmpi sge, %1, %67 : vector<1x128xi32>
    %c96_i32 = arith.constant 96 : i32
    %69 = vector.broadcast %c96_i32 : i32 to vector<1x128xi32>
    %70 = arith.cmpi slt, %1, %69 : vector<1x128xi32>
    %71 = arith.andi %68, %70 : vector<1x128xi1>
    %cst_16 = arith.constant 0.000000e+00 : f32
    %72 = vector.shape_cast %71 : vector<1x128xi1> to vector<1x128xi1>
    %73 = vector.broadcast %72 : vector<1x128xi1> to vector<8x128xi1>
    %74 = vector.broadcast %cst_16 : f32 to vector<8x128xf32>
    %75 = arith.select %73, %0, %74 : vector<8x128xi1>, vector<8x128xf32>
    %cst_17 = arith.constant 0.000000e+00 : f32
    %76 = vector.shape_cast %71 : vector<1x128xi1> to vector<1x128xi1>
    %77 = vector.broadcast %76 : vector<1x128xi1> to vector<8x128xi1>
    %78 = vector.broadcast %cst_17 : f32 to vector<8x128xf32>
    %79 = arith.select %77, %2, %78 : vector<8x128xi1>, vector<8x128xf32>
    %cst_18 = arith.constant dense<0.000000e+00> : vector<8xf32>
    %80 = vector.multi_reduction <add>, %75, %cst_18 [1] : vector<8x128xf32> to vector<8xf32>
    %81 = vector.shape_cast %80 : vector<8xf32> to vector<8x1xf32>
    %cst_19 = arith.constant 3.125000e-02 : f32
    %82 = vector.broadcast %cst_19 : f32 to vector<8x1xf32>
    %83 = arith.mulf %81, %82 : vector<8x1xf32>
    %cst_20 = arith.constant dense<0.000000e+00> : vector<8xf32>
    %84 = vector.multi_reduction <add>, %79, %cst_20 [1] : vector<8x128xf32> to vector<8xf32>
    %85 = vector.shape_cast %84 : vector<8xf32> to vector<8x1xf32>
    %cst_21 = arith.constant 3.125000e-02 : f32
    %86 = vector.broadcast %cst_21 : f32 to vector<8x1xf32>
    %87 = arith.mulf %85, %86 : vector<8x1xf32>
    %88 = vector.shape_cast %71 : vector<1x128xi1> to vector<1x128xi1>
    %89 = vector.broadcast %88 : vector<1x128xi1> to vector<8x128xi1>
    %90 = vector.shape_cast %83 : vector<8x1xf32> to vector<8x1xf32>
    %91 = vector.broadcast %90 : vector<8x1xf32> to vector<8x128xf32>
    %92 = arith.select %89, %91, %61 : vector<8x128xi1>, vector<8x128xf32>
    %93 = vector.shape_cast %71 : vector<1x128xi1> to vector<1x128xi1>
    %94 = vector.broadcast %93 : vector<1x128xi1> to vector<8x128xi1>
    %95 = vector.shape_cast %87 : vector<8x1xf32> to vector<8x1xf32>
    %96 = vector.broadcast %95 : vector<8x1xf32> to vector<8x128xf32>
    %97 = arith.select %94, %96, %66 : vector<8x128xi1>, vector<8x128xf32>
    %c96_i32_22 = arith.constant 96 : i32
    %98 = vector.broadcast %c96_i32_22 : i32 to vector<1x128xi32>
    %99 = arith.cmpi sge, %1, %98 : vector<1x128xi32>
    %c128_i32 = arith.constant 128 : i32
    %100 = vector.broadcast %c128_i32 : i32 to vector<1x128xi32>
    %101 = arith.cmpi slt, %1, %100 : vector<1x128xi32>
    %102 = arith.andi %99, %101 : vector<1x128xi1>
    %cst_23 = arith.constant 0.000000e+00 : f32
    %103 = vector.shape_cast %102 : vector<1x128xi1> to vector<1x128xi1>
    %104 = vector.broadcast %103 : vector<1x128xi1> to vector<8x128xi1>
    %105 = vector.broadcast %cst_23 : f32 to vector<8x128xf32>
    %106 = arith.select %104, %0, %105 : vector<8x128xi1>, vector<8x128xf32>
    %cst_24 = arith.constant 0.000000e+00 : f32
    %107 = vector.shape_cast %102 : vector<1x128xi1> to vector<1x128xi1>
    %108 = vector.broadcast %107 : vector<1x128xi1> to vector<8x128xi1>
    %109 = vector.broadcast %cst_24 : f32 to vector<8x128xf32>
    %110 = arith.select %108, %2, %109 : vector<8x128xi1>, vector<8x128xf32>
    %cst_25 = arith.constant dense<0.000000e+00> : vector<8xf32>
    %111 = vector.multi_reduction <add>, %106, %cst_25 [1] : vector<8x128xf32> to vector<8xf32>
    %112 = vector.shape_cast %111 : vector<8xf32> to vector<8x1xf32>
    %cst_26 = arith.constant 3.125000e-02 : f32
    %113 = vector.broadcast %cst_26 : f32 to vector<8x1xf32>
    %114 = arith.mulf %112, %113 : vector<8x1xf32>
    %cst_27 = arith.constant dense<0.000000e+00> : vector<8xf32>
    %115 = vector.multi_reduction <add>, %110, %cst_27 [1] : vector<8x128xf32> to vector<8xf32>
    %116 = vector.shape_cast %115 : vector<8xf32> to vector<8x1xf32>
    %cst_28 = arith.constant 3.125000e-02 : f32
    %117 = vector.broadcast %cst_28 : f32 to vector<8x1xf32>
    %118 = arith.mulf %116, %117 : vector<8x1xf32>
    %119 = vector.shape_cast %102 : vector<1x128xi1> to vector<1x128xi1>
    %120 = vector.broadcast %119 : vector<1x128xi1> to vector<8x128xi1>
    %121 = vector.shape_cast %114 : vector<8x1xf32> to vector<8x1xf32>
    %122 = vector.broadcast %121 : vector<8x1xf32> to vector<8x128xf32>
    %123 = arith.select %120, %122, %92 : vector<8x128xi1>, vector<8x128xf32>
    %124 = vector.shape_cast %102 : vector<1x128xi1> to vector<1x128xi1>
    %125 = vector.broadcast %124 : vector<1x128xi1> to vector<8x128xi1>
    %126 = vector.shape_cast %118 : vector<8x1xf32> to vector<8x1xf32>
    %127 = vector.broadcast %126 : vector<8x1xf32> to vector<8x128xf32>
    %128 = arith.select %125, %127, %97 : vector<8x128xi1>, vector<8x128xf32>
    %129 = arith.mulf %123, %123 : vector<8x128xf32>
    %130 = arith.subf %128, %129 : vector<8x128xf32>
    %cst_29 = arith.constant 9.99999974E-6 : f32
    %131 = vector.broadcast %cst_29 : f32 to vector<8x128xf32>
    %132 = arith.addf %130, %131 : vector<8x128xf32>
    %133 = math.rsqrt %132 : vector<8x128xf32>
    %c0_30 = arith.constant 0 : index
    %c0_31 = arith.constant 0 : index
    %134 = vector.load %arg2[%c0_30, %c0_31] : memref<1x128xf32, #tpu.memory_space<vmem>>, vector<1x128xf32>
    %c0_32 = arith.constant 0 : index
    %c0_33 = arith.constant 0 : index
    %135 = vector.load %arg3[%c0_32, %c0_33] : memref<1x128xf32, #tpu.memory_space<vmem>>, vector<1x128xf32>
    %136 = vector.broadcast %134 : vector<1x128xf32> to vector<8x128xf32>
    %137 = arith.mulf %133, %136 : vector<8x128xf32>
    %138 = arith.mulf %123, %137 : vector<8x128xf32>
    %139 = vector.broadcast %135 : vector<1x128xf32> to vector<8x128xf32>
    %140 = arith.subf %139, %138 : vector<8x128xf32>
    %141 = arith.mulf %0, %137 : vector<8x128xf32>
    %142 = arith.addf %141, %140 : vector<8x128xf32>
    %c0_34 = arith.constant 0 : index
    %c0_35 = arith.constant 0 : index
    %143 = vector.load %arg4[%c0_34, %c0_35] : memref<8x128xf32, #tpu.memory_space<vmem>>, vector<8x128xf32>
    tpu.vector_store %arg4[%c0_34, %c0_35], %142 {strides = array<i32>} : memref<8x128xf32, #tpu.memory_space<vmem>>, vector<8x128xf32>,
    return
  }
  func.func @transform_0(%arg0: i32) -> (i32, i32) {
    %c0_i32 = arith.constant 0 : i32
    %c0_i32_0 = arith.constant 0 : i32
    return %arg0, %c0_i32 : i32, i32
  }
  func.func @transform_1(%arg0: i32) -> (i32, i32) {
    %c0_i32 = arith.constant 0 : i32
    %c0_i32_0 = arith.constant 0 : i32
    %c0_i32_1 = arith.constant 0 : i32
    return %c0_i32, %c0_i32_0 : i32, i32
  }
  func.func @transform_2(%arg0: i32) -> (i32, i32) {
    %c0_i32 = arith.constant 0 : i32
    %c0_i32_0 = arith.constant 0 : i32
    %c0_i32_1 = arith.constant 0 : i32
    return %c0_i32, %c0_i32_0 : i32, i32
  }
  func.func @transform_3(%arg0: i32) -> (i32, i32) {
    %c0_i32 = arith.constant 0 : i32
    %c0_i32_0 = arith.constant 0 : i32
    return %arg0, %c0_i32 : i32, i32
  }
}

</mosaic_0001>

<llo_original>
// kernel: tpu_custom_call.1
$region0: #{tpu_custom_call.1}
  #allocation0 [shape = 'u32[]', space=smem, size = 0x4, offset = 0x4, fixed_abs, tag = 'smem constant byte address 0x4 - core index']
  #allocation1 [shape = 'u32[144,128]{1,0:T(1,128)}', space=vmem, size = 0x12000, scoped, tag = 'internal scratch']
  %s0 = inlined_call_operand.hbm [shape: f32[4,128], index: 0, kind: input, shape index: {}]
  %s1 = inlined_call_operand.vmem [shape: f32[1,128], index: 1, kind: input, shape index: {}]
  %s2 = inlined_call_operand.vmem [shape: f32[1,128], index: 2, kind: input, shape index: {}]
  %s3 = inlined_call_operand.hbm [shape: f32[4,128], index: 3, kind: output, shape index: {}]
  %s4 = sld [smem:[#allocation0]]
  $region26: #{tpu_custom_call.1} parent=0
    _
  %s6 = ssub.s32 1, %s4
  %s7 = scalar_select 0, %s6, %s4
  $region1: #{tpu_custom_call.1} parent=0
    #allocation2 [shape = 'u8[4096]{0}', space=vmem, size = 0x1000, scoped, tag = 'input window, operand 0, single buffered']
    #allocation3 [shape = 's32[1]{0}', space=sflag, size = 0x4, scoped, tag = 'scoped memory for tpu_custom_call.1']
    #allocation4 [shape = 's32[1]{0}', space=sflag, size = 0x4, scoped, tag = 'scoped memory for tpu_custom_call.1']
    #allocation5 [shape = 'u8[4096]{0}', space=vmem, size = 0x1000, scoped, tag = 'output window, operand 0, single buffered']
    %8 = vsyncpa [#allocation3], 0
    %9 = vsyncpa [#allocation4], 0
    // Predicated region
    $region2: #{tpu_custom_call.1} parent=1 // pred_check
      _
    $region3: #{tpu_custom_call.1} parent=1 // pred_check_branch
      %11 = sbr.rel (0) target = $region5
    $region4: #{tpu_custom_call.1} parent=1 // pred_region
      %s13 = ssub.s32 128, 64
      %14 = vsyncadd [#allocation3], %s13
      %s15 = sshll.u32 [#allocation2], 4
      %s16 = int_to_ptr.vmem [resolvable:$true] %s15
      %21 = dma.hbm_to_vmem [thread:$0]  %s0, 64, %s16, [#allocation3], 64, 64, 4
    $region5: #{tpu_custom_call.1} parent=1 // pred_fallthru
      _
    // Predicated region
    $region6: #{tpu_custom_call.1} parent=1 // pred_check
      _
    $region7: #{tpu_custom_call.1} parent=1 // pred_check_branch
      %23 = sbr.rel (0) target = $region9
    $region8: #{tpu_custom_call.1} parent=1 // pred_region
      _
    $region9: #{tpu_custom_call.1} parent=1 // pred_fallthru
      _
    // Predicated region
    $region10: #{tpu_custom_call.1} parent=1 // pred_check
      _
    $region11: #{tpu_custom_call.1} parent=1 // pred_check_branch
      %25 = sbr.rel (0) target = $region13
    $region12: #{tpu_custom_call.1} parent=1 // pred_region
      _
    $region13: #{tpu_custom_call.1} parent=1 // pred_fallthru
      _
    // Predicated region
    $region14: #{tpu_custom_call.1} parent=1 // pred_check
      _
    $region15: #{tpu_custom_call.1} parent=1 // pred_check_branch
      %27 = sbr.rel (0) target = $region17
    $region16: #{tpu_custom_call.1} parent=1 // pred_region
      %28 = dma.done [#allocation3], 128
    $region17: #{tpu_custom_call.1} parent=1 // pred_fallthru
      _
    %v29 = vld [vmem:[#allocation2] sm:$0xff]
    %v30 = vlaneseq
    %v31 = vand.u32 %v30, 127
    %v32 = vmul.f32 %v29, %v29
    %vm33 = vcmp.ge.s32.totalorder %v31, 0
    %vm34 = vcmp.lt.s32.totalorder %v31, 32
    %vm35 = vmand %vm33, %vm34
    %v36 = vsel %vm35, 1, 0
    %vm37 = vcmp.eq.s32.totalorder %v36, 1
    %v38 = vsel %vm37, %v29, 0.0
    %v39 = vsel %vm37, %v32, 0.0
    %40 = vadd.xlane.f32.xlu0 %v38
    %v41 = vpop.xlane.xlu0 %40
    %v42 = vmul.f32 %v41, 0.03125
    %43 = vadd.xlane.f32.xlu0 %v39
    %v44 = vpop.xlane.xlu0 %43
    %v45 = vmul.f32 %v44, 0.03125
    %v46 = vsel %vm37, %v42, 0.0
    %v47 = vsel %vm37, %v45, 0.0
    %vm48 = vcmp.ge.s32.totalorder %v31, 32
    %vm49 = vcmp.lt.s32.totalorder %v31, 64
    %vm50 = vmand %vm48, %vm49
    %v51 = vsel %vm50, 1, 0
    %vm52 = vcmp.eq.s32.totalorder %v51, 1
    %v53 = vsel %vm52, %v29, 0.0
    %v54 = vsel %vm52, %v32, 0.0
    %55 = vadd.xlane.f32.xlu0 %v53
    %v56 = vpop.xlane.xlu0 %55
    %v57 = vmul.f32 %v56, 0.03125
    %58 = vadd.xlane.f32.xlu0 %v54
    %v59 = vpop.xlane.xlu0 %58
    %v60 = vmul.f32 %v59, 0.03125
    %v61 = vsel %vm52, %v57, %v46
    %v62 = vsel %vm52, %v60, %v47
    %vm63 = vcmp.ge.s32.totalorder %v31, 64
    %vm64 = vcmp.lt.s32.totalorder %v31, 96
    %vm65 = vmand %vm63, %vm64
    %v66 = vsel %vm65, 1, 0
    %vm67 = vcmp.eq.s32.totalorder %v66, 1
    %v68 = vsel %vm67, %v29, 0.0
    %v69 = vsel %vm67, %v32, 0.0
    %70 = vadd.xlane.f32.xlu0 %v68
    %v71 = vpop.xlane.xlu0 %70
    %v72 = vmul.f32 %v71, 0.03125
    %73 = vadd.xlane.f32.xlu0 %v69
    %v74 = vpop.xlane.xlu0 %73
    %v75 = vmul.f32 %v74, 0.03125
    %v76 = vsel %vm67, %v72, %v61
    %v77 = vsel %vm67, %v75, %v62
    %vm78 = vcmp.ge.s32.totalorder %v31, 96
    %vm79 = vcmp.lt.s32.totalorder %v31, 128
    %vm80 = vmand %vm78, %vm79
    %v81 = vsel %vm80, 1, 0
    %vm82 = vcmp.eq.s32.totalorder %v81, 1
    %v83 = vsel %vm82, %v29, 0.0
    %v84 = vsel %vm82, %v32, 0.0
    %85 = vadd.xlane.f32.xlu0 %v83
    %v86 = vpop.xlane.xlu0 %85
    %v87 = vmul.f32 %v86, 0.03125
    %88 = vadd.xlane.f32.xlu0 %v84
    %v89 = vpop.xlane.xlu0 %88
    %v90 = vmul.f32 %v89, 0.03125
    %v91 = vsel %vm82, %v87, %v76
    %v92 = vsel %vm82, %v90, %v77
    %v93 = vmul.f32 %v91, %v91
    %v94 = vsub.f32 %v92, %v93
    %v95 = vadd.f32 %v94, 1e-05
    %v96 = vrsqrt.pop %v95
    %v97 = vld [vmem:[%s1] sm:$0x1]
    %v98 = vld [vmem:[%s2] sm:$0x1]
    %v100 = vlaneseq
    %v101 = vshrl.u32 %v100, 7
    %v102 = vsub.s32 0, %v101
    %v103 = vrot.slane %v97, %v102
    %v105 = vmul.f32 %v96, %v103
    %v106 = vmul.f32 %v91, %v105
    %v108 = vlaneseq
    %v109 = vshrl.u32 %v108, 7
    %v110 = vsub.s32 0, %v109
    %v111 = vrot.slane %v98, %v110
    %v113 = vsub.f32 %v111, %v106
    %v114 = vmul.f32 %v29, %v105
    %v115 = vadd.f32 %v114, %v113
    %116 = vst [vmem:[#allocation5] sm:$0xff] %v115
    // Predicated region
    $region18: #{tpu_custom_call.1} parent=1 // pred_check
      _
    $region19: #{tpu_custom_call.1} parent=1 // pred_check_branch
      %118 = sbr.rel (0) target = $region21
    $region20: #{tpu_custom_call.1} parent=1 // pred_region
      %s120 = ssub.s32 128, 64
      %121 = vsyncadd [#allocation4], %s120
      %s122 = sshll.u32 [#allocation5], 4
      %s123 = int_to_ptr.vmem [resolvable:$true] %s122
      %128 = dma.vmem_to_hbm [thread:$0]  %s123, 64, %s3, [#allocation4], 64, 64, 4
    $region21: #{tpu_custom_call.1} parent=1 // pred_fallthru
      _
    // Predicated region
    $region22: #{tpu_custom_call.1} parent=1 // pred_check
      _
    $region23: #{tpu_custom_call.1} parent=1 // pred_check_branch
      %130 = sbr.rel (0) target = $region25
    $region24: #{tpu_custom_call.1} parent=1 // pred_region
      %131 = dma.done [#allocation4], 128
    $region25: #{tpu_custom_call.1} parent=1 // pred_fallthru
      _
    %132 = vsyncpa [#allocation3], 1
    %133 = vsyncpa [#allocation4], 1

</llo_original>
